<compile_context>
chip_gen: v5e
topology: v5e:2x2
jax: 0.10.0
libtpu: 0.0.40
codegen_flags: <defaults>
</compile_context>

<pallas_src>
import math

import jax
import jax.numpy as jnp
from jax.experimental import pallas as pl
from jax.experimental.pallas import tpu as pltpu

BN_EPS = 1e-8            # Dice default: nn.BatchNorm1d(embed_size, eps=1e-8)
_LANES = 128
_SUBLANES = 8
_MAX_TILE_BYTES = 8 * 1024 * 1024      # ~8 MiB per input tile (per review: 2-8 MiB/step)
_TARGET_ROWS = 2048
_TARGET_WIDTH = 1024
_VMEM_LIMIT = 48 * 1024 * 1024         # 2x(in+out) 8 MiB tiles + slack; fits v7x 64 MiB VMEM


def _cdiv(a, b):
    return -(-a // b)


def _round_up(x, m):
    return _cdiv(x, m) * m


def _fold_params(alpha, gamma, beta, mean, var, eps):
    """Fold eval-mode BN into per-feature affine and pack [scale, shift, alpha, 1-alpha]."""
    f32 = jnp.float32
    scale = gamma.astype(f32) * jax.lax.rsqrt(var.astype(f32) + eps)
    shift = beta.astype(f32) - mean.astype(f32) * scale
    a = alpha.reshape(-1).astype(f32)            # accepts (E,) or PyTorch's (E, 1)
    return jnp.stack([scale, shift, a, 1.0 - a])  # (4, E)


# ---------------------------------------------------------------------------
# Kernels
# ---------------------------------------------------------------------------

def _dice2d_kernel(x_ref, p_ref, o_ref):
    """Fused Dice: out = x * (alpha + x_p * (1 - alpha)), x_p = sigmoid(x*scale + shift)."""
    x = x_ref[...].astype(jnp.float32)            # (br, width); f32 compute (v5e-safe)
    scale = p_ref[0:1, :]
    shift = p_ref[1:2, :]
    alpha = p_ref[2:3, :]
    oma = p_ref[3:4, :]                           # 1 - alpha, precomputed on host
    # sigmoid(z) = 0.5*tanh(0.5*z) + 0.5  -> single EUP push instead of exp+reciprocal
    x_p = 0.5 * jnp.tanh((x * scale + shift) * 0.5) + 0.5
    o_ref[...] = (x * (alpha + x_p * oma)).astype(o_ref.dtype)


def _dice3d_kernel(x_ref, p_ref, eye_ref, o_ref):
    """Per-batch Dice on a (L, E) block, written transposed as (E, L) (fused transpose)."""
    x = x_ref[...].astype(jnp.float32)            # (L, E)
    scale = p_ref[0:1, :]
    shift = p_ref[1:2, :]
    alpha = p_ref[2:3, :]
    oma = p_ref[3:4, :]
    x_p = 0.5 * jnp.tanh((x * scale + shift) * 0.5) + 0.5
    y = x * (alpha + x_p * oma)                   # (L, E)
    # (L, E) -> (E, L) on the otherwise-idle MXU: y_t[e, l] = sum_k I[e, k] * y[l, k].
    # Contraction over the last dim of both operands (q @ k^T pattern) lowers for any L/E and is
    # bit-exact for finite inputs (single nonzero product per output element, f32 accumulation).
    y_t = jax.lax.dot_general(eye_ref[...], y, (((1,), (1,)), ((), ())),
                              preferred_element_type=jnp.float32)
    o_ref[...] = y_t.astype(o_ref.dtype)          # (E, L)


# ---------------------------------------------------------------------------
# Host wrappers
# ---------------------------------------------------------------------------

def _dice_2d(x, params4, *, target_rows=_TARGET_ROWS, target_width=_TARGET_WIDTH,
             max_tile_bytes=_MAX_TILE_BYTES):
    """Dice over a (N, E) activation with per-E parameters. Returns (N, E) in x.dtype."""
    n, e = x.shape
    io_dtype = x.dtype
    itemsize = jnp.dtype(io_dtype).itemsize

    # --- choose lane-dense repack factor: width = e*rep, a multiple of 128 when possible ---
    if e % _LANES == 0:
        rep = 1
    else:
        lcm = e * _LANES // math.gcd(e, _LANES)
        rep = lcm // e if lcm <= max(target_width, _LANES) else 1
    if (e * rep) % _LANES == 0:
        # widen up to ~target_width lanes as long as enough rows remain
        while rep * 2 * e <= target_width and _cdiv(n, rep * 2) >= _SUBLANES:
            rep *= 2
    width = e * rep

    # --- choose row block so each step moves a few MiB, minimal padding ---
    rows = _cdiv(n, rep)
    br_cap = max(_SUBLANES, (max_tile_bytes // max(width * itemsize, 1)) // _SUBLANES * _SUBLANES)
    br_target = max(_SUBLANES, min(br_cap, target_rows))
    num_blocks = _cdiv(rows, br_target)
    br = _round_up(_cdiv(rows, num_blocks), _SUBLANES)
    rows_pad = br * num_blocks
    n_pad = rows_pad * rep

    if n_pad != n:
        x = jnp.pad(x, ((0, n_pad - n), (0, 0)))   # single host pad (only when needed)
    x2 = x.reshape(rows_pad, width)                 # contiguous reshape -> free

    p2 = jnp.tile(params4, (1, rep)) if rep > 1 else params4   # (4, width), tiny

    out2 = pl.pallas_call(
        _dice2d_kernel,
        out_shape=jax.ShapeDtypeStruct((rows_pad, width), io_dtype),
        grid_spec=pltpu.PrefetchScalarGridSpec(
            num_scalar_prefetch=0,
            grid=(num_blocks,),
            in_specs=[
                pl.BlockSpec((br, width), lambda i: (i, 0)),    # activation tile
                pl.BlockSpec((4, width), lambda i: (0, 0)),     # packed params (resident)
            ],
            out_specs=pl.BlockSpec((br, width), lambda i: (i, 0)),
        ),
        compiler_params=pltpu.CompilerParams(
            dimension_semantics=("parallel",),
            vmem_limit_bytes=_VMEM_LIMIT,
        ),
        cost_estimate=pl.CostEstimate(
            flops=6 * rows_pad * width,
            transcendentals=rows_pad * width,
            bytes_accessed=2 * rows_pad * width * itemsize,
        ),
    )(x2, p2)

    out = out2.reshape(n_pad, e)                    # contiguous reshape -> free
    if n_pad != n:
        out = out[:n]                               # only materializes when we actually padded
    return out


def _dice_3d(x, params4):
    """Dice over (B, L, E); returns (B, E, L) (PyTorch module's return layout)."""
    b, l, e = x.shape
    io_dtype = x.dtype
    itemsize = jnp.dtype(io_dtype).itemsize
    eye = jnp.eye(e, dtype=jnp.float32)

    return pl.pallas_call(
        _dice3d_kernel,
        out_shape=jax.ShapeDtypeStruct((b, e, l), io_dtype),
        grid_spec=pltpu.PrefetchScalarGridSpec(
            num_scalar_prefetch=0,
            grid=(b,),
            in_specs=[
                pl.BlockSpec((None, l, e), lambda i: (i, 0, 0)),   # one batch, full (L, E)
                pl.BlockSpec((4, e), lambda i: (0, 0)),            # packed params (resident)
                pl.BlockSpec((e, e), lambda i: (0, 0)),            # identity for MXU transpose
            ],
            out_specs=pl.BlockSpec((None, e, l), lambda i: (i, 0, 0)),
        ),
        compiler_params=pltpu.CompilerParams(
            dimension_semantics=("parallel",),
            vmem_limit_bytes=32 * 1024 * 1024,
        ),
        cost_estimate=pl.CostEstimate(
            flops=b * (6 * l * e + 2 * e * e * l),
            transcendentals=b * l * e,
            bytes_accessed=2 * b * l * e * itemsize,
        ),
    )(x, params4, eye)


def dice_forward(x, params, *, dim=2, eps=BN_EPS):
    """Pallas Dice forward matching the PyTorch module (eval-mode BN, native-dtype I/O)."""
    assert dim in (2, 3)
    assert x.ndim == dim
    params4 = _fold_params(params['alpha'], params['gamma'], params['beta'],
                           params['mean'], params['var'], eps)
    if dim == 2:
        return _dice_2d(x, params4)
    return _dice_3d(x, params4)


# ---------------------------------------------------------------------------
# Pure-JAX reference + param init
# ---------------------------------------------------------------------------

def dice_reference(x, params, *, dim=2, eps=BN_EPS):
    """Pure-JAX reference with the module's math (eval-mode BN)."""
    alpha = params['alpha'].reshape(-1)
    gamma, beta, mean, var = params['gamma'], params['beta'], params['mean'], params['var']
    if dim == 2:
        xn = (x - mean) * jax.lax.rsqrt(var + eps) * gamma + beta
        x_p = jax.nn.sigmoid(xn)
        return alpha * (1.0 - x_p) * x + x_p * x
    xt = jnp.transpose(x, (0, 2, 1))                                   # (B, E, L)
    c = lambda v: v[None, :, None]
    xn = (xt - c(mean)) * jax.lax.rsqrt(c(var) + eps) * c(gamma) + c(beta)
    x_p = jax.nn.sigmoid(xn)
    return c(alpha) * (1.0 - x_p) * xt + x_p * xt                      # (B, E, L)


def init_params(key, e):
    """Per-feature Dice alpha and eval-mode BN stats; randomized to exercise the math."""
    ka, kg, kb, km, kv = jax.random.split(key, 5)
    return dict(
        alpha=0.25 * jax.random.normal(ka, (e,), jnp.float32),   # learnable (zeros at init in PyTorch)
        gamma=1.0 + 0.1 * jax.random.normal(kg, (e,), jnp.float32),
        beta=0.1 * jax.random.normal(kb, (e,), jnp.float32),
        mean=0.1 * jax.random.normal(km, (e,), jnp.float32),
        var=jnp.abs(1.0 + 0.1 * jax.random.normal(kv, (e,), jnp.float32)),
    )


if __name__ == "__main__":
    E = 32                       # embed_size
    B2 = 64                      # batch for dim=2
    B3, L3 = 4, 16               # batch, seq_len for dim=3

    key = jax.random.PRNGKey(0)
    kx2, kx3, kp = jax.random.split(key, 3)
    x2 = jax.random.normal(kx2, (B2, E), jnp.float32)
    x3 = jax.random.normal(kx3, (B3, L3, E), jnp.float32)
    params = init_params(kp, E)

    # dim == 2, f32 I/O
    out2 = jax.block_until_ready(dice_forward(x2, params, dim=2))
    ref2 = dice_reference(x2, params, dim=2)
    assert out2.shape == (B2, E), out2.shape
    assert jnp.allclose(out2, ref2, rtol=1e-4, atol=1e-4), float(jnp.max(jnp.abs(out2 - ref2)))

    # dim == 2, bf16 I/O (kernel computes in f32 internally, stores bf16)
    x2b = x2.astype(jnp.bfloat16)
    out2b = jax.block_until_ready(dice_forward(x2b, params, dim=2))
    ref2b = dice_reference(x2b.astype(jnp.float32), params, dim=2)
    assert out2b.dtype == jnp.bfloat16
    assert jnp.allclose(out2b.astype(jnp.float32), ref2b, rtol=2e-2, atol=2e-2)

    # dim == 3 (output in (B, E, L) layout, matching the PyTorch module)
    out3 = jax.block_until_ready(dice_forward(x3, params, dim=3))
    ref3 = dice_reference(x3, params, dim=3)
    assert out3.shape == (B3, E, L3), out3.shape
    assert jnp.allclose(out3, ref3, rtol=1e-4, atol=1e-4), float(jnp.max(jnp.abs(out3 - ref3)))

    print("KERNEL_OK")
</pallas_src>

<mosaic_0001>
module attributes {stable_mosaic.version = 11 : i64} {
  func.func @_dice2d_kernel(%arg0: i32, %arg1: memref<8x256xf32, #tpu.memory_space<vmem>>, %arg2: memref<4x256xf32, #tpu.memory_space<vmem>>, %arg3: memref<8x256xf32, #tpu.memory_space<vmem>>) attributes {dimension_semantics = [#tpu.dimension_semantics<parallel>], iteration_bounds = array<i64: 1>, scalar_prefetch = 0 : i64, scratch_operands = 0 : i64, tpu.core_type = #tpu.core_type<tc>, window_params = [{transform_indices = @transform_0, window_bounds = array<i64: 8, 256>}, {pipeline_mode = #tpu.pipeline_mode<synchronous>, transform_indices = @transform_1, window_bounds = array<i64: 4, 256>}, {transform_indices = @transform_2, window_bounds = array<i64: 8, 256>}]} {
    %c0 = arith.constant 0 : index
    %c0_0 = arith.constant 0 : index
    %0 = vector.load %arg1[%c0, %c0_0] : memref<8x256xf32, #tpu.memory_space<vmem>>, vector<8x256xf32>
    %c0_1 = arith.constant 0 : index
    %c0_2 = arith.constant 0 : index
    %1 = vector.load %arg2[%c0_1, %c0_2] : memref<4x256xf32, #tpu.memory_space<vmem>>, vector<1x256xf32>
    %c1 = arith.constant 1 : index
    %c0_3 = arith.constant 0 : index
    %2 = vector.load %arg2[%c1, %c0_3] : memref<4x256xf32, #tpu.memory_space<vmem>>, vector<1x256xf32>
    %c2 = arith.constant 2 : index
    %c0_4 = arith.constant 0 : index
    %3 = vector.load %arg2[%c2, %c0_4] : memref<4x256xf32, #tpu.memory_space<vmem>>, vector<1x256xf32>
    %c3 = arith.constant 3 : index
    %c0_5 = arith.constant 0 : index
    %4 = vector.load %arg2[%c3, %c0_5] : memref<4x256xf32, #tpu.memory_space<vmem>>, vector<1x256xf32>
    %5 = vector.broadcast %1 : vector<1x256xf32> to vector<8x256xf32>
    %6 = arith.mulf %0, %5 : vector<8x256xf32>
    %7 = vector.broadcast %2 : vector<1x256xf32> to vector<8x256xf32>
    %8 = arith.addf %6, %7 : vector<8x256xf32>
    %cst = arith.constant 5.000000e-01 : f32
    %9 = vector.broadcast %cst : f32 to vector<8x256xf32>
    %10 = arith.mulf %8, %9 : vector<8x256xf32>
    %11 = math.tanh %10 : vector<8x256xf32>
    %cst_6 = arith.constant 5.000000e-01 : f32
    %12 = vector.broadcast %cst_6 : f32 to vector<8x256xf32>
    %13 = arith.mulf %12, %11 : vector<8x256xf32>
    %cst_7 = arith.constant 5.000000e-01 : f32
    %14 = vector.broadcast %cst_7 : f32 to vector<8x256xf32>
    %15 = arith.addf %13, %14 : vector<8x256xf32>
    %16 = vector.broadcast %4 : vector<1x256xf32> to vector<8x256xf32>
    %17 = arith.mulf %15, %16 : vector<8x256xf32>
    %18 = vector.broadcast %3 : vector<1x256xf32> to vector<8x256xf32>
    %19 = arith.addf %18, %17 : vector<8x256xf32>
    %20 = arith.mulf %0, %19 : vector<8x256xf32>
    %c0_8 = arith.constant 0 : index
    %c0_9 = arith.constant 0 : index
    %21 = vector.load %arg3[%c0_8, %c0_9] : memref<8x256xf32, #tpu.memory_space<vmem>>, vector<8x256xf32>
    tpu.vector_store %arg3[%c0_8, %c0_9], %20 {strides = array<i32>} : memref<8x256xf32, #tpu.memory_space<vmem>>, vector<8x256xf32>,
    return
  }
  func.func @transform_0(%arg0: i32) -> (i32, i32) {
    %c0_i32 = arith.constant 0 : i32
    %c0_i32_0 = arith.constant 0 : i32
    return %arg0, %c0_i32 : i32, i32
  }
  func.func @transform_1(%arg0: i32) -> (i32, i32) {
    %c0_i32 = arith.constant 0 : i32
    %c0_i32_0 = arith.constant 0 : i32
    %c0_i32_1 = arith.constant 0 : i32
    return %c0_i32, %c0_i32_0 : i32, i32
  }
  func.func @transform_2(%arg0: i32) -> (i32, i32) {
    %c0_i32 = arith.constant 0 : i32
    %c0_i32_0 = arith.constant 0 : i32
    return %arg0, %c0_i32 : i32, i32
  }
}

</mosaic_0001>

<llo_original>
// kernel: tpu_custom_call.1
$region0: #{tpu_custom_call.1}
  #allocation0 [shape = 'u32[]', space=smem, size = 0x4, offset = 0x4, fixed_abs, tag = 'smem constant byte address 0x4 - core index']
  #allocation1 [shape = 'u32[72,128]{1,0:T(1,128)}', space=vmem, size = 0x9000, scoped, tag = 'internal scratch']
  %s0 = inlined_call_operand.hbm [shape: f32[8,256], index: 0, kind: input, shape index: {}]
  %s1 = inlined_call_operand.hbm [shape: f32[4,256], index: 1, kind: input, shape index: {}]
  %s2 = inlined_call_operand.hbm [shape: f32[8,256], index: 2, kind: output, shape index: {}]
  %s3 = sld [smem:[#allocation0]]
  $region26: #{tpu_custom_call.1} parent=0
    _
  %s5 = ssub.s32 1, %s3
  %s6 = scalar_select 0, %s5, %s3
  $region1: #{tpu_custom_call.1} parent=0
    #allocation2 [shape = 'u8[8192]{0}', space=vmem, size = 0x2000, scoped, tag = 'input window, operand 0, single buffered']
    #allocation3 [shape = 's32[1]{0}', space=sflag, size = 0x4, scoped, tag = 'scoped memory for tpu_custom_call.1']
    #allocation4 [shape = 's32[1]{0}', space=sflag, size = 0x4, scoped, tag = 'scoped memory for tpu_custom_call.1']
    #allocation5 [shape = 'u8[4096]{0}', space=vmem, size = 0x1000, scoped, tag = 'input window, operand 1, single buffered']
    #allocation6 [shape = 's32[1]{0}', space=sflag, size = 0x4, scoped, tag = 'scoped memory for tpu_custom_call.1']
    #allocation7 [shape = 'u8[8192]{0}', space=vmem, size = 0x2000, scoped, tag = 'output window, operand 0, single buffered']
    %7 = vsyncpa [#allocation3], 0
    %8 = vsyncpa [#allocation6], 0
    %9 = vsyncpa [#allocation4], 0
    // Predicated region
    $region2: #{tpu_custom_call.1} parent=1 // pred_check
      _
    $region3: #{tpu_custom_call.1} parent=1 // pred_check_branch
      %11 = sbr.rel (0) target = $region5
    $region4: #{tpu_custom_call.1} parent=1 // pred_region
      %13 = vsyncadd [#allocation3], 0
      %s15 = sshll.u32 %s0, 4
      %s16 = int_to_ptr.hbm [resolvable:$true] %s15
      %s17 = sshll.u32 [#allocation2], 4
      %s18 = int_to_ptr.vmem [resolvable:$true] %s17
      %20 = dma.hbm_to_vmem [thread:$0]  %s16, 256, %s18, [#allocation3]
    $region5: #{tpu_custom_call.1} parent=1 // pred_fallthru
      _
    // Predicated region
    $region6: #{tpu_custom_call.1} parent=1 // pred_check
      _
    $region7: #{tpu_custom_call.1} parent=1 // pred_check_branch
      %22 = sbr.rel (0) target = $region9
    $region8: #{tpu_custom_call.1} parent=1 // pred_region
      %24 = vsyncadd [#allocation6], 0
      %s26 = sshll.u32 %s1, 4
      %s27 = int_to_ptr.hbm [resolvable:$true] %s26
      %s28 = sshll.u32 [#allocation5], 4
      %s29 = int_to_ptr.vmem [resolvable:$true] %s28
      %31 = dma.hbm_to_vmem [thread:$0]  %s27, 128, %s29, [#allocation6]
    $region9: #{tpu_custom_call.1} parent=1 // pred_fallthru
      _
    // Predicated region
    $region10: #{tpu_custom_call.1} parent=1 // pred_check
      _
    $region11: #{tpu_custom_call.1} parent=1 // pred_check_branch
      %33 = sbr.rel (0) target = $region13
    $region12: #{tpu_custom_call.1} parent=1 // pred_region
      %35 = dma.done [#allocation3], 256
    $region13: #{tpu_custom_call.1} parent=1 // pred_fallthru
      _
    // Predicated region
    $region14: #{tpu_custom_call.1} parent=1 // pred_check
      _
    $region15: #{tpu_custom_call.1} parent=1 // pred_check_branch
      %37 = sbr.rel (0) target = $region17
    $region16: #{tpu_custom_call.1} parent=1 // pred_region
      %39 = dma.done [#allocation6], 128
    $region17: #{tpu_custom_call.1} parent=1 // pred_fallthru
      _
    %v40 = vld [vmem:[#allocation2] sm:$0xff]
    %v41 = vld [vmem:[#allocation2 + $0x8] sm:$0xff]
    %v42 = vld [vmem:[#allocation5] ss:$4 sm:$0x3]
    %s43 = scalar_lea.vmem [#allocation5], 1
    %v44 = vld [vmem:[%s43] ss:$4 sm:$0x3]
    %s45 = scalar_lea.vmem [#allocation5], 2
    %v46 = vld [vmem:[%s45] ss:$4 sm:$0x3]
    %s47 = scalar_lea.vmem [#allocation5], 3
    %v48 = vld [vmem:[%s47] ss:$4 sm:$0x3]
    %v50 = vperm.slane %v42, 0
    %v51 = vperm.slane %v42, 1
    %v54 = vmul.f32 %v40, %v50
    %v55 = vmul.f32 %v41, %v51
    %v57 = vperm.slane %v44, 0
    %v58 = vperm.slane %v44, 1
    %v61 = vadd.f32 %v54, %v57
    %v62 = vadd.f32 %v55, %v58
    %v63 = vmul.f32 %v61, 0.5
    %v64 = vmul.f32 %v62, 0.5
    %v65 = vtanh.pop %v63
    %v66 = vtanh.pop %v64
    %v67 = vmul.f32 %v65, 0.5
    %v68 = vmul.f32 %v66, 0.5
    %v69 = vadd.f32 %v67, 0.5
    %v70 = vadd.f32 %v68, 0.5
    %v72 = vperm.slane %v48, 0
    %v73 = vperm.slane %v48, 1
    %v76 = vmul.f32 %v69, %v72
    %v77 = vmul.f32 %v70, %v73
    %v79 = vperm.slane %v46, 0
    %v80 = vperm.slane %v46, 1
    %v83 = vadd.f32 %v79, %v76
    %v84 = vadd.f32 %v80, %v77
    %v85 = vmul.f32 %v40, %v83
    %v86 = vmul.f32 %v41, %v84
    %87 = vst [vmem:[#allocation7] sm:$0xff] %v85
    %88 = vst [vmem:[#allocation7 + $0x8] sm:$0xff] %v86
    // Predicated region
    $region18: #{tpu_custom_call.1} parent=1 // pred_check
      _
    $region19: #{tpu_custom_call.1} parent=1 // pred_check_branch
      %90 = sbr.rel (0) target = $region21
    $region20: #{tpu_custom_call.1} parent=1 // pred_region
      %92 = vsyncadd [#allocation4], 0
      %s94 = sshll.u32 [#allocation7], 4
      %s95 = int_to_ptr.vmem [resolvable:$true] %s94
      %s96 = sshll.u32 %s2, 4
      %s97 = int_to_ptr.hbm [resolvable:$true] %s96
      %99 = dma.vmem_to_hbm [thread:$0]  %s95, 256, %s97, [#allocation4]
    $region21: #{tpu_custom_call.1} parent=1 // pred_fallthru
      _
    // Predicated region
    $region22: #{tpu_custom_call.1} parent=1 // pred_check
      _
    $region23: #{tpu_custom_call.1} parent=1 // pred_check_branch
      %101 = sbr.rel (0) target = $region25
    $region24: #{tpu_custom_call.1} parent=1 // pred_region
      %103 = dma.done [#allocation4], 256
    $region25: #{tpu_custom_call.1} parent=1 // pred_fallthru
      _
    %104 = vsyncpa [#allocation3], 1
    %105 = vsyncpa [#allocation6], 1
    %106 = vsyncpa [#allocation4], 1

</llo_original>
